<compile_context>
chip_gen: v7x
topology: tpu7x:2x2x1
jax: 0.10.0
libtpu: 0.0.40
codegen_flags: <defaults>
</compile_context>

<pallas_src>
import functools

import jax
import jax.numpy as jnp
from jax import lax
from jax.experimental import pallas as pl
from jax.experimental.pallas import tpu as pltpu

# ---- module hyper-parameters (MXU/lane friendly: all widths = 128) ---------
NUM_INPUTS   = 128
NUM_HIDDENS1 = 128
NUM_HIDDENS2 = 128
NUM_OUTPUTS  = 16            # logical output width
OUT_PAD      = 128           # lane-dense padded output width
DROPOUT1     = 0.2
DROPOUT2     = 0.5
TILE_M       = 128           # batch rows per grid step

assert NUM_INPUTS == NUM_HIDDENS1 == NUM_HIDDENS2 == OUT_PAD, \
    "packed-weight slab assumes equal layer widths"


# ---------------------------------------------------------------------------
# Portable in-kernel PRNG: counter-based integer hash (int32-only ops).
# ---------------------------------------------------------------------------
def _i32(u):
    """Python uint32 constant -> jnp.int32 with the same bit pattern."""
    u &= 0xFFFFFFFF
    return jnp.int32(u - (1 << 32) if u >= (1 << 31) else u)


def _lsr(x, k):
    """Logical right shift of int32 by k (mask emulates unsigned shift)."""
    return (x >> k) & jnp.int32((1 << (32 - k)) - 1)


def _rand_u24(shape, row_off, key, salt):
    """Per-element pseudo-random int32 uniform in [0, 2**24)."""
    r = lax.broadcasted_iota(jnp.int32, shape, 0) + row_off   # global row id
    c = lax.broadcasted_iota(jnp.int32, shape, 1)             # column id
    x = (r * _i32(0x9E3779B1) + c * _i32(0x85EBCA77)
         + key + jnp.int32(salt) * _i32(0xC2B2AE3D))
    # lowbias32-style finalizer (wrapping int32 arithmetic == uint32 bitwise)
    x = x ^ _lsr(x, 16)
    x = x * _i32(0x7FEB352D)
    x = x ^ _lsr(x, 15)
    x = x * _i32(0x846CA68B)
    x = x ^ _lsr(x, 16)
    return x & jnp.int32(0x00FFFFFF)


def _fold_seed(seed, step):
    """Mix a per-run seed with a step counter (host-side Python ints)."""
    u = (int(seed) * 0x9E3779B1 + int(step) * 0x85EBCA77) & 0xFFFFFFFF
    return u - (1 << 32) if u >= (1 << 31) else u


# ---------------------------------------------------------------------------
# Kernel
# ---------------------------------------------------------------------------
def _net_kernel(seed_ref, x_ref, w_ref, b_ref, out_ref, *, is_training):
    tile = pl.program_id(0)
    key = seed_ref[0]
    row_off = tile * TILE_M

    def relu_dropout(z, rate, salt):
        # Fused ReLU + inverted-dropout mask + scale (single VPU select).
        if (not is_training) or rate == 0.0:
            return jnp.maximum(z, 0.0)
        if rate == 1.0:
            return jnp.zeros_like(z)
        bits = _rand_u24(z.shape, row_off, key, salt)
        thr = jnp.int32(int(rate * float(1 << 24)))      # keep iff bits >= thr
        keep = bits >= thr
        scale = 1.0 / (1.0 - rate)
        return jnp.where(keep & (z > 0.0), z * scale, 0.0)

    x = x_ref[...]

    # lin1 + ReLU + dropout1
    z1 = jnp.dot(x, w_ref[0], preferred_element_type=jnp.float32) + b_ref[0:1, :]
    h1 = relu_dropout(z1, DROPOUT1, salt=1)

    # lin2 + ReLU + dropout2
    z2 = jnp.dot(h1, w_ref[1], preferred_element_type=jnp.float32) + b_ref[1:2, :]
    h2 = relu_dropout(z2, DROPOUT2, salt=2)

    # lin3 (no activation), lane-dense 128-wide store (padded cols are zero)
    out_ref[...] = (jnp.dot(h2, w_ref[2], preferred_element_type=jnp.float32)
                    + b_ref[2:3, :]).astype(out_ref.dtype)


# ---------------------------------------------------------------------------
# Wrapper
# ---------------------------------------------------------------------------
def net_forward(x, w_packed, b_packed, *, seed, step=0, is_training=True):
    """w_packed: (3, 128, 128) slab [w1, w2, w3_pad]; b_packed: (3, 128)."""
    x2 = x.reshape((-1, NUM_INPUTS)).astype(jnp.float32)
    batch = x2.shape[0]
    padded = pl.cdiv(batch, TILE_M) * TILE_M
    if padded != batch:                       # pad rows to full sublane tiles
        x2 = jnp.pad(x2, ((0, padded - batch), (0, 0)))
    n_tiles = padded // TILE_M

    seed_arr = jnp.asarray([_fold_seed(seed, step)], dtype=jnp.int32)
    kernel = functools.partial(_net_kernel, is_training=is_training)

    out = pl.pallas_call(
        kernel,
        out_shape=jax.ShapeDtypeStruct((padded, OUT_PAD), jnp.float32),
        grid_spec=pltpu.PrefetchScalarGridSpec(
            num_scalar_prefetch=1,            # seed lives in SMEM
            grid=(n_tiles,),
            in_specs=[
                pl.BlockSpec((TILE_M, NUM_INPUTS), lambda i, s: (i, 0)),
                pl.BlockSpec((3, NUM_HIDDENS1, NUM_HIDDENS1),
                             lambda i, s: (0, 0, 0)),       # resident weights
                pl.BlockSpec((3, NUM_HIDDENS1), lambda i, s: (0, 0)),
            ],
            out_specs=pl.BlockSpec((TILE_M, OUT_PAD), lambda i, s: (i, 0)),
        ),
        compiler_params=pltpu.CompilerParams(
            dimension_semantics=("parallel",)),   # batch tiles shard across TCs
    )(seed_arr, x2, w_packed, b_packed)

    return out[:batch, :NUM_OUTPUTS]


def init_params(key):
    """nn.Linear-style uniform(-1/sqrt(fan_in), +) init; returns packed slabs."""
    ks = jax.random.split(key, 6)

    def linear(kw, kb, fan_in, fan_out):
        bound = 1.0 / (fan_in ** 0.5)
        w = jax.random.uniform(kw, (fan_in, fan_out), jnp.float32, -bound, bound)
        b = jax.random.uniform(kb, (1, fan_out), jnp.float32, -bound, bound)
        return w, b

    w1, b1 = linear(ks[0], ks[1], NUM_INPUTS, NUM_HIDDENS1)
    w2, b2 = linear(ks[2], ks[3], NUM_HIDDENS1, NUM_HIDDENS2)
    w3, b3 = linear(ks[4], ks[5], NUM_HIDDENS2, NUM_OUTPUTS)

    # Zero-pad layer 3 to 128 output lanes (lane-dense stores in the kernel).
    w3p = jnp.zeros((NUM_HIDDENS2, OUT_PAD), jnp.float32).at[:, :NUM_OUTPUTS].set(w3)
    b3p = jnp.zeros((1, OUT_PAD), jnp.float32).at[:, :NUM_OUTPUTS].set(b3)

    w_packed = jnp.stack([w1, w2, w3p], axis=0)          # (3, 128, 128)
    b_packed = jnp.concatenate([b1, b2, b3p], axis=0)    # (3, 128)
    return w_packed, b_packed


if __name__ == "__main__":
    key = jax.random.PRNGKey(0)
    k_param, k_x = jax.random.split(key)

    w_packed, b_packed = init_params(k_param)

    BATCH = 256                                  # amortizes launch/DMA overhead
    x = jax.random.normal(k_x, (BATCH, NUM_INPUTS), dtype=jnp.float32)

    # --- eval mode (no dropout): check against a pure-JAX reference ---------
    out_eval = jax.block_until_ready(
        net_forward(x, w_packed, b_packed, seed=0, is_training=False))
    w1, w2 = w_packed[0], w_packed[1]
    w3 = w_packed[2][:, :NUM_OUTPUTS]
    b1, b2 = b_packed[0:1], b_packed[1:2]
    b3 = b_packed[2:3, :NUM_OUTPUTS]
    h1 = jnp.maximum(x @ w1 + b1, 0.0)
    h2 = jnp.maximum(h1 @ w2 + b2, 0.0)
    ref = h2 @ w3 + b3
    assert out_eval.shape == (BATCH, NUM_OUTPUTS)
    assert bool(jnp.allclose(out_eval, ref, atol=2e-2, rtol=2e-2))

    # --- training mode (dropout active; seed mixed with step counter) -------
    out_train = jax.block_until_ready(
        net_forward(x, w_packed, b_packed, seed=1234, step=0, is_training=True))
    assert out_train.shape == (BATCH, NUM_OUTPUTS)
    assert bool(jnp.all(jnp.isfinite(out_train)))

    print("KERNEL_OK")
</pallas_src>

<mosaic_0001>
module attributes {stable_mosaic.version = 11 : i64} {
  func.func @_net_kernel(%arg0: i32, %arg1: memref<1xi32, #tpu.memory_space<smem>>, %arg2: memref<128x128xf32, #tpu.memory_space<vmem>>, %arg3: memref<3x128x128xf32, #tpu.memory_space<vmem>>, %arg4: memref<3x128xf32, #tpu.memory_space<vmem>>, %arg5: memref<128x128xf32, #tpu.memory_space<vmem>>) attributes {dimension_semantics = [#tpu.dimension_semantics<parallel>], iteration_bounds = array<i64: 2>, scalar_prefetch = 1 : i64, scratch_operands = 0 : i64, tpu.core_type = #tpu.core_type<tc>, window_params = [{transform_indices = @transform_0, window_bounds = array<i64: 128, 128>}, {pipeline_mode = #tpu.pipeline_mode<synchronous>, transform_indices = @transform_1, window_bounds = array<i64: 3, 128, 128>}, {pipeline_mode = #tpu.pipeline_mode<synchronous>, transform_indices = @transform_2, window_bounds = array<i64: 3, 128>}, {transform_indices = @transform_3, window_bounds = array<i64: 128, 128>}]} {
    %c0 = arith.constant 0 : index
    %c0_0 = arith.constant 0 : index
    %0 = vector.load %arg2[%c0, %c0_0] : memref<128x128xf32, #tpu.memory_space<vmem>>, vector<128x128xf32>
    %c0_1 = arith.constant 0 : index
    %c0_2 = arith.constant 0 : index
    %c0_3 = arith.constant 0 : index
    %1 = vector.load %arg3[%c0_1, %c0_2, %c0_3] : memref<3x128x128xf32, #tpu.memory_space<vmem>>, vector<1x128x128xf32>
    %2 = vector.shape_cast %1 : vector<1x128x128xf32> to vector<128x128xf32>
    %cst = arith.constant dense<0.000000e+00> : vector<128x128xf32>
    %3 = tpu.matmul %0, %2, %cst {dimension_numbers = #tpu.dot_dimension_numbers<[1], [0], [0], [1], [0, 0, 1, 1], [], []>} : vector<128x128xf32>, vector<128x128xf32>, vector<128x128xf32> -> vector<128x128xf32>
    %c0_4 = arith.constant 0 : index
    %c0_5 = arith.constant 0 : index
    %4 = vector.load %arg4[%c0_4, %c0_5] : memref<3x128xf32, #tpu.memory_space<vmem>>, vector<1x128xf32>
    %5 = vector.broadcast %4 : vector<1x128xf32> to vector<128x128xf32>
    %6 = arith.addf %3, %5 : vector<128x128xf32>
    %cst_6 = arith.constant 0.000000e+00 : f32
    %7 = vector.broadcast %cst_6 : f32 to vector<128x128xf32>
    %8 = arith.maximumf %6, %7 : vector<128x128xf32>
    %c1 = arith.constant 1 : index
    %c0_7 = arith.constant 0 : index
    %c0_8 = arith.constant 0 : index
    %9 = vector.load %arg3[%c1, %c0_7, %c0_8] : memref<3x128x128xf32, #tpu.memory_space<vmem>>, vector<1x128x128xf32>
    %10 = vector.shape_cast %9 : vector<1x128x128xf32> to vector<128x128xf32>
    %cst_9 = arith.constant dense<0.000000e+00> : vector<128x128xf32>
    %11 = tpu.matmul %8, %10, %cst_9 {dimension_numbers = #tpu.dot_dimension_numbers<[1], [0], [0], [1], [0, 0, 1, 1], [], []>} : vector<128x128xf32>, vector<128x128xf32>, vector<128x128xf32> -> vector<128x128xf32>
    %c1_10 = arith.constant 1 : index
    %c0_11 = arith.constant 0 : index
    %12 = vector.load %arg4[%c1_10, %c0_11] : memref<3x128xf32, #tpu.memory_space<vmem>>, vector<1x128xf32>
    %13 = vector.broadcast %12 : vector<1x128xf32> to vector<128x128xf32>
    %14 = arith.addf %11, %13 : vector<128x128xf32>
    %cst_12 = arith.constant 0.000000e+00 : f32
    %15 = vector.broadcast %cst_12 : f32 to vector<128x128xf32>
    %16 = arith.maximumf %14, %15 : vector<128x128xf32>
    %c2 = arith.constant 2 : index
    %c0_13 = arith.constant 0 : index
    %c0_14 = arith.constant 0 : index
    %17 = vector.load %arg3[%c2, %c0_13, %c0_14] : memref<3x128x128xf32, #tpu.memory_space<vmem>>, vector<1x128x128xf32>
    %18 = vector.shape_cast %17 : vector<1x128x128xf32> to vector<128x128xf32>
    %cst_15 = arith.constant dense<0.000000e+00> : vector<128x128xf32>
    %19 = tpu.matmul %16, %18, %cst_15 {dimension_numbers = #tpu.dot_dimension_numbers<[1], [0], [0], [1], [0, 0, 1, 1], [], []>} : vector<128x128xf32>, vector<128x128xf32>, vector<128x128xf32> -> vector<128x128xf32>
    %c2_16 = arith.constant 2 : index
    %c0_17 = arith.constant 0 : index
    %20 = vector.load %arg4[%c2_16, %c0_17] : memref<3x128xf32, #tpu.memory_space<vmem>>, vector<1x128xf32>
    %21 = vector.broadcast %20 : vector<1x128xf32> to vector<128x128xf32>
    %22 = arith.addf %19, %21 : vector<128x128xf32>
    %c0_18 = arith.constant 0 : index
    %c0_19 = arith.constant 0 : index
    %23 = vector.load %arg5[%c0_18, %c0_19] : memref<128x128xf32, #tpu.memory_space<vmem>>, vector<128x128xf32>
    tpu.vector_store %arg5[%c0_18, %c0_19], %22 {strides = array<i32>} : memref<128x128xf32, #tpu.memory_space<vmem>>, vector<128x128xf32>,
    return
  }
  func.func @transform_0(%arg0: i32, %arg1: memref<1xi32, #tpu.memory_space<smem>>) -> (i32, i32) {
    %c0_i32 = arith.constant 0 : i32
    %c0_i32_0 = arith.constant 0 : i32
    return %arg0, %c0_i32 : i32, i32
  }
  func.func @transform_1(%arg0: i32, %arg1: memref<1xi32, #tpu.memory_space<smem>>) -> (i32, i32, i32) {
    %c0_i32 = arith.constant 0 : i32
    %c0_i32_0 = arith.constant 0 : i32
    %c0_i32_1 = arith.constant 0 : i32
    %c0_i32_2 = arith.constant 0 : i32
    return %c0_i32, %c0_i32_0, %c0_i32_1 : i32, i32, i32
  }
  func.func @transform_2(%arg0: i32, %arg1: memref<1xi32, #tpu.memory_space<smem>>) -> (i32, i32) {
    %c0_i32 = arith.constant 0 : i32
    %c0_i32_0 = arith.constant 0 : i32
    %c0_i32_1 = arith.constant 0 : i32
    return %c0_i32, %c0_i32_0 : i32, i32
  }
  func.func @transform_3(%arg0: i32, %arg1: memref<1xi32, #tpu.memory_space<smem>>) -> (i32, i32) {
    %c0_i32 = arith.constant 0 : i32
    %c0_i32_0 = arith.constant 0 : i32
    return %arg0, %c0_i32 : i32, i32
  }
}

</mosaic_0001>

<llo_original>
// kernel: tpu_custom_call.1
$region0: #{tpu_custom_call.1}
  #allocation0 [shape = 'u32[]', space=smem, size = 0x4, offset = 0x4, fixed_abs, tag = 'smem constant byte address 0x4 - core index']
  #allocation1 [shape = 'u32[144,128]{1,0:T(1,128)}', space=vmem, size = 0x12000, scoped, tag = 'internal scratch']
  #allocation2 [shape = 's32[1]{0}', space=sflag, size = 0x4, scoped, tag = 'scoped memory for tpu_custom_call.1']
  #allocation3 [shape = 's32[1]{0:T(128)S(6)}', space=smem, size = 0x200, scoped, tag = 'prefetched SMEM operand 0']
  %s0 = inlined_call_operand.<no memory space> [shape: s32[1], index: 0, kind: input, shape index: {}]
  %s1 = inlined_call_operand.hbm [shape: f32[256,128], index: 1, kind: input, shape index: {}]
  %s2 = inlined_call_operand.hbm [shape: f32[3,128,128], index: 2, kind: input, shape index: {}]
  %s3 = inlined_call_operand.vmem [shape: f32[3,128], index: 3, kind: input, shape index: {}]
  %s4 = inlined_call_operand.hbm [shape: f32[256,128], index: 4, kind: output, shape index: {}]
  %s5 = sld [smem:[#allocation0]]
  $region53: #{tpu_custom_call.1} parent=0
    _
  %s7 = ssub.s32 1, %s5
  %s8 = scalar_select 0, %s7, %s5
  %9 = sst [smem:[#allocation3]] %s0
  $region1: #{tpu_custom_call.1} parent=0
    #allocation4 [shape = 'u8[131072]{0}', space=vmem, size = 0x20000, scoped, tag = 'input window, operand 1']
    #allocation5 [shape = 's32[2]{0}', space=sflag, size = 0x8, scoped, tag = 'scoped memory for tpu_custom_call.1']
    #allocation6 [shape = 's32[2]{0}', space=sflag, size = 0x8, scoped, tag = 'scoped memory for tpu_custom_call.1']
    #allocation7 [shape = 'u8[196608]{0}', space=vmem, size = 0x30000, scoped, tag = 'input window, operand 2, single buffered']
    #allocation8 [shape = 's32[1]{0}', space=sflag, size = 0x4, scoped, tag = 'scoped memory for tpu_custom_call.1']
    #allocation9 [shape = 'u8[131072]{0}', space=vmem, size = 0x20000, scoped, tag = 'output window, operand 0']
    %10 = vsyncpa [#allocation5], 0
    %s11 = scalar_lea.sflag [#allocation5], 1
    %12 = vsyncpa %s11, 0
    %13 = vsyncpa [#allocation8], 0
    %14 = vsyncpa [#allocation6], 0
    %s15 = scalar_lea.sflag [#allocation6], 1
    %16 = vsyncpa %s15, 0
    loop: start=0, step=1, limit=4
    $region2: #{tpu_custom_call.1} parent=1 // loop_pre_header
      _
    $region3: #{tpu_custom_call.1} parent=1 // loop_header
      %s18 = sphi 0, %s22
      %p19 = scmp.ge.s32.totalorder %s18, 4
      %s28 = sphi 0, %s30
      %s31 = sphi 0, %s28
      %s32 = sphi 0, %s31
      %s48 = sphi 0, %s32
      %s52 = sphi 0, %s52
      %s54 = sphi 0, %s52
      %s55 = sphi 0, %s54
      %s69 = sphi 0, %s55
      %s73 = sphi 0, %s73
      %s75 = sphi 0, %s73
      %s76 = sphi 0, %s75
      %s90 = sphi 0, %s76
      %s96 = sphi 0, %s98
      %s99 = sphi 0, %s96
      %s100 = sphi 0, %s99
      %s116 = sphi 0, %s100
    $region4: #{tpu_custom_call.1} parent=1 // loop_header_branch
      %21 = sbr.rel (%p19) target = $region8
    $region5: #{tpu_custom_call.1} parent=1 // loop_body
      %s23 = ssub.s32 %s18, 1
      %s24 = ssub.s32 %s18, 2
      %s25 = sadd.s32 %s18, 1
      %s26 = ssub.s32 %s18, %s25
      %p27 = scmp.eq.s32.totalorder %s26, 0
      %s29 = sadd.s32 %s28, 1
      %s30 = scalar_select %p27, %s28, %s29
      %p33 = pneg %p27
      %p34 = scmp.eq.s32.totalorder %s18, 1
      %p35 = por %p33, %p34
      %p36 = scmp.ne.s32.totalorder %s28, %s31
      %p37 = scmp.eq.s32.totalorder %s18, 0
      %p38 = por %p36, %p37
      %p39 = scmp.ne.s32.totalorder %s28, %s31
      %p40 = scmp.eq.s32.totalorder %s23, 1
      %p41 = por %p39, %p40
      %p42 = scmp.ne.s32.totalorder %s31, %s32
      %p43 = scmp.eq.s32.totalorder %s23, 0
      %p44 = por %p42, %p43
      %p45 = scmp.ne.s32.totalorder %s31, %s32
      %p46 = scmp.eq.s32.totalorder %s24, 1
      %p47 = por %p45, %p46
      %p49 = scmp.ne.s32.totalorder %s32, %s48
      %p50 = scmp.eq.s32.totalorder %s24, 0
      %p51 = por %p49, %p50
      %s53 = sadd.s32 %s52, 1
      %p56 = scmp.eq.s32.totalorder %s18, 1
      %p57 = scmp.ne.s32.totalorder %s52, %s54
      %p58 = scmp.eq.s32.totalorder %s18, 0
      %p59 = por %p57, %p58
      %p60 = scmp.ne.s32.totalorder %s52, %s54
      %p61 = scmp.eq.s32.totalorder %s23, 1
      %p62 = por %p60, %p61
      %p63 = scmp.ne.s32.totalorder %s54, %s55
      %p64 = scmp.eq.s32.totalorder %s23, 0
      %p65 = por %p63, %p64
      %p66 = scmp.ne.s32.totalorder %s54, %s55
      %p67 = scmp.eq.s32.totalorder %s24, 1
      %p68 = por %p66, %p67
      %p70 = scmp.ne.s32.totalorder %s55, %s69
      %p71 = scmp.eq.s32.totalorder %s24, 0
      %p72 = por %p70, %p71
      %s74 = sadd.s32 %s73, 1
      %p77 = scmp.eq.s32.totalorder %s18, 1
      %p78 = scmp.ne.s32.totalorder %s73, %s75
      %p79 = scmp.eq.s32.totalorder %s18, 0
      %p80 = por %p78, %p79
      %p81 = scmp.ne.s32.totalorder %s73, %s75
      %p82 = scmp.eq.s32.totalorder %s23, 1
      %p83 = por %p81, %p82
      %p84 = scmp.ne.s32.totalorder %s75, %s76
      %p85 = scmp.eq.s32.totalorder %s23, 0
      %p86 = por %p84, %p85
      %p87 = scmp.ne.s32.totalorder %s75, %s76
      %p88 = scmp.eq.s32.totalorder %s24, 1
      %p89 = por %p87, %p88
      %p91 = scmp.ne.s32.totalorder %s76, %s90
      %p92 = scmp.eq.s32.totalorder %s24, 0
      %p93 = por %p91, %p92
      %s94 = ssub.s32 %s18, %s25
      %p95 = scmp.eq.s32.totalorder %s94, 0
      %s97 = sadd.s32 %s96, 1
      %s98 = scalar_select %p95, %s96, %s97
      %p101 = pneg %p95
      %p102 = scmp.eq.s32.totalorder %s18, 1
      %p103 = por %p101, %p102
      %p104 = scmp.ne.s32.totalorder %s96, %s99
      %p105 = scmp.eq.s32.totalorder %s18, 0
      %p106 = por %p104, %p105
      %p107 = scmp.ne.s32.totalorder %s96, %s99
      %p108 = scmp.eq.s32.totalorder %s23, 1
      %p109 = por %p107, %p108
      %p110 = scmp.ne.s32.totalorder %s99, %s100
      %p111 = scmp.eq.s32.totalorder %s23, 0
      %p112 = por %p110, %p111
      %p113 = scmp.ne.s32.totalorder %s99, %s100
      %p114 = scmp.eq.s32.totalorder %s24, 1
      %p115 = por %p113, %p114
      %p117 = scmp.ne.s32.totalorder %s100, %s116
      %p118 = scmp.eq.s32.totalorder %s24, 0
      %p119 = por %p117, %p118
      %p120 = scmp.le.s32.totalorder 1, %s18
      %p121 = scmp.lt.s32.totalorder %s18, 3
      %p122 = pnand %p120, %p121
      %p123 = pneg %p122
      // Predicated region
      $region9: #{tpu_custom_call.1} parent=5 // pred_check
        _
      $region10: #{tpu_custom_call.1} parent=5 // pred_check_branch
        %125 = sbr.rel (%p122) target = $region12
      $region11: #{tpu_custom_call.1} parent=5 // pred_region
        %s126 = ssub.s32 %s18, 1
        // Predicated region
        $region13: #{tpu_custom_call.1} parent=11 // pred_check
          %p127 = pneg %p65
        $region14: #{tpu_custom_call.1} parent=11 // pred_check_branch
          %129 = sbr.rel (%p127) target = $region16
        $region15: #{tpu_custom_call.1} parent=11 // pred_region
          %s131 = ssub.s32 6144, 6144
          %132 = vsyncadd [#allocation8], %s131
          %s133 = sshll.u32 [#allocation7], 4
          %s134 = int_to_ptr.vmem [resolvable:$true] %s133
          %139 = dma.hbm_to_vmem [thread:$0]  %s2, 6144, %s134, [#allocation8], 128, 128, 8
        $region16: #{tpu_custom_call.1} parent=11 // pred_fallthru
          _
        // Predicated region
        $region17: #{tpu_custom_call.1} parent=11 // pred_check
          %p140 = pneg %p86
        $region18: #{tpu_custom_call.1} parent=11 // pred_check_branch
          %142 = sbr.rel (%p140) target = $region20
        $region19: #{tpu_custom_call.1} parent=11 // pred_region
          _
        $region20: #{tpu_custom_call.1} parent=11 // pred_fallthru
          _
      $region12: #{tpu_custom_call.1} parent=5 // pred_fallthru
        _
      %p143 = scmp.lt.s32.totalorder %s18, 2
      // Predicated region
      $region21: #{tpu_custom_call.1} parent=5 // pred_check
        %p144 = pneg %p143
      $region22: #{tpu_custom_call.1} parent=5 // pred_check_branch
        %146 = sbr.rel (%p144) target = $region24
      $region23: #{tpu_custom_call.1} parent=5 // pred_region
        // Predicated region
        $region25: #{tpu_custom_call.1} parent=23 // pred_check
          %p147 = pneg %p38
        $region26: #{tpu_custom_call.1} parent=23 // pred_check_branch
          %149 = sbr.rel (%p147) target = $region28
        $region27: #{tpu_custom_call.1} parent=23 // pred_region
          %s150 = sand.u32 %s28, 1
          %s151 = scalar_lea.sflag [#allocation5], %s150
          %s152 = sand.u32 %s28, 1
          %s153 = smul.addr %s152, 128
          %s154 = scalar_lea.vmem [#allocation4], %s153
          %s155 = smul.u32 16, %s18
          %s157 = ssub.s32 2048, 2048
          %158 = vsyncadd %s151, %s157
          %s159 = smul.addr %s155, 128
          %s160 = scalar_lea.hbm %s1, %s159
          %s161 = sshll.u32 %s154, 4
          %s162 = int_to_ptr.vmem [resolvable:$true] %s161
          %167 = dma.hbm_to_vmem [thread:$0]  %s160, 2048, %s162, %s151, 128, 128, 8
        $region28: #{tpu_custom_call.1} parent=23 // pred_fallthru
          _
      $region24: #{tpu_custom_call.1} parent=5 // pred_fallthru
        _
      %p168 = scmp.le.s32.totalorder 1, %s18
      %p169 = scmp.lt.s32.totalorder %s18, 3
      %p170 = pnand %p168, %p169
      %p171 = pneg %p170
      // Predicated region
      $region29: #{tpu_custom_call.1} parent=5 // pred_check
        _
      $region30: #{tpu_custom_call.1} parent=5 // pred_check_branch
        %173 = sbr.rel (%p170) target = $region32
      $region31: #{tpu_custom_call.1} parent=5 // pred_region
        %s174 = ssub.s32 %s18, 1
        %s175 = sand.u32 %s31, 1
        %s176 = scalar_lea.sflag [#allocation5], %s175
        %s177 = sand.u32 %s31, 1
        %s178 = smul.addr %s177, 128
        %s179 = scalar_lea.vmem [#allocation4], %s178
        // Predicated region
        $region33: #{tpu_custom_call.1} parent=31 // pred_check
          %p180 = pneg %p44
        $region34: #{tpu_custom_call.1} parent=31 // pred_check_branch
          %182 = sbr.rel (%p180) target = $region36
        $region35: #{tpu_custom_call.1} parent=31 // pred_region
          %183 = dma.done %s176, 2048
        $region36: #{tpu_custom_call.1} parent=31 // pred_fallthru
          _
        // Predicated region
        $region37: #{tpu_custom_call.1} parent=31 // pred_check
          %p184 = pneg %p65
        $region38: #{tpu_custom_call.1} parent=31 // pred_check_branch
          %186 = sbr.rel (%p184) target = $region40
        $region39: #{tpu_custom_call.1} parent=31 // pred_region
          %187 = dma.done [#allocation8], 6144
        $region40: #{tpu_custom_call.1} parent=31 // pred_fallthru
          _
        %s188 = sand.u32 %s31, 1
        %s189 = scalar_lea.sflag [#allocation5], %s188
        %s190 = sand.u32 %s31, 1
        %s191 = smul.addr %s190, 128
        %s192 = scalar_lea.vmem [#allocation4], %s191
        %p193 = pneg %p44
        %p194 = pneg %p41
        %p195 = pneg %p65
        %p196 = pneg %p62
        %p197 = pneg %p86
        %p198 = pneg %p83
        %p199 = pneg %p112
        %p200 = pneg %p109
        %s201 = sand.u32 %s99, 1
        %s202 = scalar_lea.sflag [#allocation6], %s201
        %s203 = sand.u32 %s99, 1
        %s204 = smul.addr %s203, 128
        %s205 = scalar_lea.vmem [#allocation9], %s204
        %s206 = smul.u32 16, %s23
        %s207 = smul.u32 16, %s23
        %v208 = vld [vmem:[%s179] sm:$0xff]
        %v209 = vld [vmem:[%s179 + $0x8] sm:$0xff]
        %v210 = vld [vmem:[%s179 + $0x10] sm:$0xff]
        %v211 = vld [vmem:[%s179 + $0x18] sm:$0xff]
        %v212 = vld [vmem:[%s179 + $0x20] sm:$0xff]
        %v213 = vld [vmem:[%s179 + $0x28] sm:$0xff]
        %v214 = vld [vmem:[%s179 + $0x30] sm:$0xff]
        %v215 = vld [vmem:[%s179 + $0x38] sm:$0xff]
        %v216 = vld [vmem:[%s179 + $0x40] sm:$0xff]
        %v217 = vld [vmem:[%s179 + $0x48] sm:$0xff]
        %v218 = vld [vmem:[%s179 + $0x50] sm:$0xff]
        %v219 = vld [vmem:[%s179 + $0x58] sm:$0xff]
        %v220 = vld [vmem:[%s179 + $0x60] sm:$0xff]
        %v221 = vld [vmem:[%s179 + $0x68] sm:$0xff]
        %v222 = vld [vmem:[%s179 + $0x70] sm:$0xff]
        %v223 = vld [vmem:[%s179 + $0x78] sm:$0xff]
        %v224 = vld [vmem:[#allocation7] sm:$0xff]
        %v225 = vld [vmem:[#allocation7 + $0x8] sm:$0xff]
        %v226 = vld [vmem:[#allocation7 + $0x10] sm:$0xff]
        %v227 = vld [vmem:[#allocation7 + $0x18] sm:$0xff]
        %v228 = vld [vmem:[#allocation7 + $0x20] sm:$0xff]
        %v229 = vld [vmem:[#allocation7 + $0x28] sm:$0xff]
        %v230 = vld [vmem:[#allocation7 + $0x30] sm:$0xff]
        %v231 = vld [vmem:[#allocation7 + $0x38] sm:$0xff]
        %v232 = vld [vmem:[#allocation7 + $0x40] sm:$0xff]
        %v233 = vld [vmem:[#allocation7 + $0x48] sm:$0xff]
        %v234 = vld [vmem:[#allocation7 + $0x50] sm:$0xff]
        %v235 = vld [vmem:[#allocation7 + $0x58] sm:$0xff]
        %v236 = vld [vmem:[#allocation7 + $0x60] sm:$0xff]
        %v237 = vld [vmem:[#allocation7 + $0x68] sm:$0xff]
        %v238 = vld [vmem:[#allocation7 + $0x70] sm:$0xff]
        %v239 = vld [vmem:[#allocation7 + $0x78] sm:$0xff]
        %v240 = vld [vmem:[%s3] sm:$0x1]
        %v241 = vlaneseq
        %v242 = vshrl.u32 %v241, 7
        %v243 = vsub.s32 0, %v242
        %v244 = vrot.slane %v240, %v243
        %245 = vmatprep.subr.mxu0 0.0
        %246 = vmatpush1.msra.mxu0 %v224
        %247 = vmatprep.subr.mxu0 0.0
        %248 = vmatpush1.msra.mxu0 %v225
        %249 = vmatprep.subr.mxu0 0.0
        %250 = vmatpush1.msra.mxu0 %v226
        %251 = vmatprep.subr.mxu0 0.0
        %252 = vmatpush1.msra.mxu0 %v227
        %253 = vmatprep.subr.mxu0 0.0
        %254 = vmatpush1.msra.mxu0 %v228
        %255 = vmatprep.subr.mxu0 0.0
        %256 = vmatpush1.msra.mxu0 %v229
        %257 = vmatprep.subr.mxu0 0.0
        %258 = vmatpush1.msra.mxu0 %v230
        %259 = vmatprep.subr.mxu0 0.0
        %260 = vmatpush1.msra.mxu0 %v231
        %261 = vmatprep.subr.mxu0 0.0
        %262 = vmatpush1.msra.mxu0 %v232
        %263 = vmatprep.subr.mxu0 0.0
        %264 = vmatpush1.msra.mxu0 %v233
        %265 = vmatprep.subr.mxu0 0.0
        %266 = vmatpush1.msra.mxu0 %v234
        %267 = vmatprep.subr.mxu0 0.0
        %268 = vmatpush1.msra.mxu0 %v235
        %269 = vmatprep.subr.mxu0 0.0
        %270 = vmatpush1.msra.mxu0 %v236
        %271 = vmatprep.subr.mxu0 0.0
        %272 = vmatpush1.msra.mxu0 %v237
        %273 = vmatprep.subr.mxu0 0.0
        %274 = vmatpush1.msra.mxu0 %v238
        %275 = vmatprep.subr.mxu0 0.0
        %276 = vmatpush1.msra.mxu0 %v239
        %277 = vmatprep.subr.mxu0 0.0
        %278 = vmatpush1.msra.mxu0 0.0
        %279 = vmatprep.subr.mxu0 0.0
        %280 = vmatpush1.msra.mxu0 0.0
        %281 = vmatprep.subr.mxu0 0.0
        %282 = vmatpush1.msra.mxu0 0.0
        %283 = vmatprep.subr.mxu0 0.0
        %284 = vmatpush1.msra.mxu0 0.0
        %285 = vmatprep.subr.mxu0 0.0
        %286 = vmatpush1.msra.mxu0 0.0
        %287 = vmatprep.subr.mxu0 0.0
        %288 = vmatpush1.msra.mxu0 0.0
        %289 = vmatprep.subr.mxu0 0.0
        %290 = vmatpush1.msra.mxu0 0.0
        %291 = vmatprep.subr.mxu0 0.0
        %292 = vmatpush1.msra.mxu0 0.0
        %293 = vmatprep.subr.mxu0 0.0
        %294 = vmatpush1.msra.mxu0 0.0
        %295 = vmatprep.subr.mxu0 0.0
        %296 = vmatpush1.msra.mxu0 0.0
        %297 = vmatprep.subr.mxu0 0.0
        %298 = vmatpush1.msra.mxu0 0.0
        %299 = vmatprep.subr.mxu0 0.0
        %300 = vmatpush1.msra.mxu0 0.0
        %301 = vmatprep.subr.mxu0 0.0
        %302 = vmatpush1.msra.mxu0 0.0
        %303 = vmatprep.subr.mxu0 0.0
        %304 = vmatpush1.msra.mxu0 0.0
        %305 = vmatprep.subr.mxu0 0.0
        %306 = vmatpush1.msra.mxu0 0.0
        %307 = vmatprep.subr.mxu0 0.0
        %308 = vmatpush1.msra.mxu0 0.0
        %309 = vmatprep.mubr.f32.mxu0 0.0
        %310 = vmatmul.mubr.f32.gmra.mrb[0].mxu0 %v208
        %v311 = vpop.f32.mrb[0].mxu0
        %v312 = vadd.f32 %v244, %v311
        %v313 = vpop.f32.mrb[0].mxu0
        %314 = vmatprep.mubr.f32.mxu0 0.0
        %315 = vmatmul.mubr.f32.gmra.mrb[0].mxu0 %v209
        %v316 = vpop.f32.mrb[0].mxu0
        %v317 = vadd.f32 %v244, %v316
        %v318 = vpop.f32.mrb[0].mxu0
        %319 = vmatprep.mubr.f32.mxu0 0.0
        %320 = vmatmul.mubr.f32.gmra.mrb[0].mxu0 %v210
        %v321 = vpop.f32.mrb[0].mxu0
        %v322 = vadd.f32 %v244, %v321
        %v323 = vpop.f32.mrb[0].mxu0
        %324 = vmatprep.mubr.f32.mxu0 0.0
        %325 = vmatmul.mubr.f32.gmra.mrb[0].mxu0 %v211
        %v326 = vpop.f32.mrb[0].mxu0
        %v327 = vadd.f32 %v244, %v326
        %v328 = vpop.f32.mrb[0].mxu0
        %329 = vmatprep.mubr.f32.mxu0 0.0
        %330 = vmatmul.mubr.f32.gmra.mrb[0].mxu0 %v212
        %v331 = vpop.f32.mrb[0].mxu0
        %v332 = vadd.f32 %v244, %v331
        %v333 = vpop.f32.mrb[0].mxu0
        %334 = vmatprep.mubr.f32.mxu0 0.0
        %335 = vmatmul.mubr.f32.gmra.mrb[0].mxu0 %v213
        %v336 = vpop.f32.mrb[0].mxu0
        %v337 = vadd.f32 %v244, %v336
        %v338 = vpop.f32.mrb[0].mxu0
        %339 = vmatprep.mubr.f32.mxu0 0.0
        %340 = vmatmul.mubr.f32.gmra.mrb[0].mxu0 %v214
        %v341 = vpop.f32.mrb[0].mxu0
        %v342 = vadd.f32 %v244, %v341
        %v343 = vpop.f32.mrb[0].mxu0
        %344 = vmatprep.mubr.f32.mxu0 0.0
        %345 = vmatmul.mubr.f32.gmra.mrb[0].mxu0 %v215
        %v346 = vpop.f32.mrb[0].mxu0
        %v347 = vadd.f32 %v244, %v346
        %v348 = vpop.f32.mrb[0].mxu0
        %349 = vmatprep.mubr.f32.mxu0 0.0
        %350 = vmatmul.mubr.f32.gmra.mrb[0].mxu0 %v216
        %v351 = vpop.f32.mrb[0].mxu0
        %v352 = vadd.f32 %v244, %v351
        %v353 = vpop.f32.mrb[0].mxu0
        %354 = vmatprep.mubr.f32.mxu0 0.0
        %355 = vmatmul.mubr.f32.gmra.mrb[0].mxu0 %v217
        %v356 = vpop.f32.mrb[0].mxu0
        %v357 = vadd.f32 %v244, %v356
        %v358 = vpop.f32.mrb[0].mxu0
        %359 = vmatprep.mubr.f32.mxu0 0.0
        %360 = vmatmul.mubr.f32.gmra.mrb[0].mxu0 %v218
        %v361 = vpop.f32.mrb[0].mxu0
        %v362 = vadd.f32 %v244, %v361
        %v363 = vpop.f32.mrb[0].mxu0
        %364 = vmatprep.mubr.f32.mxu0 0.0
        %365 = vmatmul.mubr.f32.gmra.mrb[0].mxu0 %v219
        %v366 = vpop.f32.mrb[0].mxu0
        %v367 = vadd.f32 %v244, %v366
        %v368 = vpop.f32.mrb[0].mxu0
        %369 = vmatprep.mubr.f32.mxu0 0.0
        %370 = vmatmul.mubr.f32.gmra.mrb[0].mxu0 %v220
        %v371 = vpop.f32.mrb[0].mxu0
        %v372 = vadd.f32 %v244, %v371
        %v373 = vpop.f32.mrb[0].mxu0
        %374 = vmatprep.mubr.f32.mxu0 0.0
        %375 = vmatmul.mubr.f32.gmra.mrb[0].mxu0 %v221
        %v376 = vpop.f32.mrb[0].mxu0
        %v377 = vadd.f32 %v244, %v376
        %v378 = vpop.f32.mrb[0].mxu0
        %379 = vmatprep.mubr.f32.mxu0 0.0
        %380 = vmatmul.mubr.f32.gmra.mrb[0].mxu0 %v222
        %v381 = vpop.f32.mrb[0].mxu0
        %v382 = vadd.f32 %v244, %v381
        %v383 = vpop.f32.mrb[0].mxu0
        %384 = vmatprep.mubr.f32.mxu0 0.0
        %385 = vmatmul.mubr.f32.gmra.mrb[0].mxu0 %v223
        %v386 = vpop.f32.mrb[0].mxu0
        %v387 = vadd.f32 %v244, %v386
        %v388 = vpop.f32.mrb[0].mxu0
        %389 = vdwg.mxu0
        %v390 = vmax.f32 %v312, 0.0
        %v391 = vmax.f32 %v317, 0.0
        %v392 = vmax.f32 %v322, 0.0
        %v393 = vmax.f32 %v327, 0.0
        %v394 = vmax.f32 %v332, 0.0
        %v395 = vmax.f32 %v337, 0.0
        %v396 = vmax.f32 %v342, 0.0
        %v397 = vmax.f32 %v347, 0.0
        %v398 = vmax.f32 %v352, 0.0
        %v399 = vmax.f32 %v357, 0.0
        %v400 = vmax.f32 %v362, 0.0
        %v401 = vmax.f32 %v367, 0.0
        %v402 = vmax.f32 %v372, 0.0
        %v403 = vmax.f32 %v377, 0.0
        %v404 = vmax.f32 %v382, 0.0
        %v405 = vmax.f32 %v387, 0.0
        %s406 = scalar_lea.vmem [#allocation7], 128
        %v407 = vld [vmem:[%s406] sm:$0xff]
        %v408 = vld [vmem:[%s406 + $0x8] sm:$0xff]
        %v409 = vld [vmem:[%s406 + $0x10] sm:$0xff]
        %v410 = vld [vmem:[%s406 + $0x18] sm:$0xff]
        %v411 = vld [vmem:[%s406 + $0x20] sm:$0xff]
        %v412 = vld [vmem:[%s406 + $0x28] sm:$0xff]
        %v413 = vld [vmem:[%s406 + $0x30] sm:$0xff]
        %v414 = vld [vmem:[%s406 + $0x38] sm:$0xff]
        %v415 = vld [vmem:[%s406 + $0x40] sm:$0xff]
        %v416 = vld [vmem:[%s406 + $0x48] sm:$0xff]
        %v417 = vld [vmem:[%s406 + $0x50] sm:$0xff]
        %v418 = vld [vmem:[%s406 + $0x58] sm:$0xff]
        %v419 = vld [vmem:[%s406 + $0x60] sm:$0xff]
        %v420 = vld [vmem:[%s406 + $0x68] sm:$0xff]
        %v421 = vld [vmem:[%s406 + $0x70] sm:$0xff]
        %v422 = vld [vmem:[%s406 + $0x78] sm:$0xff]
        %v423 = vld [vmem:[%s3 + $0x1] sm:$0x1]
        %v424 = vlaneseq
        %v425 = vshrl.u32 %v424, 7
        %v426 = vsub.s32 0, %v425
        %v427 = vrot.slane %v423, %v426
        %428 = vmatprep.subr.mxu0 0.0
        %429 = vmatpush1.msra.mxu0 %v407
        %430 = vmatprep.subr.mxu0 0.0
        %431 = vmatpush1.msra.mxu0 %v408
        %432 = vmatprep.subr.mxu0 0.0
        %433 = vmatpush1.msra.mxu0 %v409
        %434 = vmatprep.subr.mxu0 0.0
        %435 = vmatpush1.msra.mxu0 %v410
        %436 = vmatprep.subr.mxu0 0.0
        %437 = vmatpush1.msra.mxu0 %v411
        %438 = vmatprep.subr.mxu0 0.0
        %439 = vmatpush1.msra.mxu0 %v412
        %440 = vmatprep.subr.mxu0 0.0
        %441 = vmatpush1.msra.mxu0 %v413
        %442 = vmatprep.subr.mxu0 0.0
        %443 = vmatpush1.msra.mxu0 %v414
        %444 = vmatprep.subr.mxu0 0.0
        %445 = vmatpush1.msra.mxu0 %v415
        %446 = vmatprep.subr.mxu0 0.0
        %447 = vmatpush1.msra.mxu0 %v416
        %448 = vmatprep.subr.mxu0 0.0
        %449 = vmatpush1.msra.mxu0 %v417
        %450 = vmatprep.subr.mxu0 0.0
        %451 = vmatpush1.msra.mxu0 %v418
        %452 = vmatprep.subr.mxu0 0.0
        %453 = vmatpush1.msra.mxu0 %v419
        %454 = vmatprep.subr.mxu0 0.0
        %455 = vmatpush1.msra.mxu0 %v420
        %456 = vmatprep.subr.mxu0 0.0
        %457 = vmatpush1.msra.mxu0 %v421
        %458 = vmatprep.subr.mxu0 0.0
        %459 = vmatpush1.msra.mxu0 %v422
        %460 = vmatprep.subr.mxu0 0.0
        %461 = vmatpush1.msra.mxu0 0.0
        %462 = vmatprep.subr.mxu0 0.0
        %463 = vmatpush1.msra.mxu0 0.0
        %464 = vmatprep.subr.mxu0 0.0
        %465 = vmatpush1.msra.mxu0 0.0
        %466 = vmatprep.subr.mxu0 0.0
        %467 = vmatpush1.msra.mxu0 0.0
        %468 = vmatprep.subr.mxu0 0.0
        %469 = vmatpush1.msra.mxu0 0.0
        %470 = vmatprep.subr.mxu0 0.0
        %471 = vmatpush1.msra.mxu0 0.0
        %472 = vmatprep.subr.mxu0 0.0
        %473 = vmatpush1.msra.mxu0 0.0
        %474 = vmatprep.subr.mxu0 0.0
        %475 = vmatpush1.msra.mxu0 0.0
        %476 = vmatprep.subr.mxu0 0.0
        %477 = vmatpush1.msra.mxu0 0.0
        %478 = vmatprep.subr.mxu0 0.0
        %479 = vmatpush1.msra.mxu0 0.0
        %480 = vmatprep.subr.mxu0 0.0
        %481 = vmatpush1.msra.mxu0 0.0
        %482 = vmatprep.subr.mxu0 0.0
        %483 = vmatpush1.msra.mxu0 0.0
        %484 = vmatprep.subr.mxu0 0.0
        %485 = vmatpush1.msra.mxu0 0.0
        %486 = vmatprep.subr.mxu0 0.0
        %487 = vmatpush1.msra.mxu0 0.0
        %488 = vmatprep.subr.mxu0 0.0
        %489 = vmatpush1.msra.mxu0 0.0
        %490 = vmatprep.subr.mxu0 0.0
        %491 = vmatpush1.msra.mxu0 0.0
        %492 = vmatprep.mubr.f32.mxu0 0.0
        %493 = vmatmul.mubr.f32.gmra.mrb[0].mxu0 %v390
        %v494 = vpop.f32.mrb[0].mxu0
        %v495 = vadd.f32 %v427, %v494
        %v496 = vpop.f32.mrb[0].mxu0
        %497 = vmatprep.mubr.f32.mxu0 0.0
        %498 = vmatmul.mubr.f32.gmra.mrb[0].mxu0 %v391
        %v499 = vpop.f32.mrb[0].mxu0
        %v500 = vadd.f32 %v427, %v499
        %v501 = vpop.f32.mrb[0].mxu0
        %502 = vmatprep.mubr.f32.mxu0 0.0
        %503 = vmatmul.mubr.f32.gmra.mrb[0].mxu0 %v392
        %v504 = vpop.f32.mrb[0].mxu0
        %v505 = vadd.f32 %v427, %v504
        %v506 = vpop.f32.mrb[0].mxu0
        %507 = vmatprep.mubr.f32.mxu0 0.0
        %508 = vmatmul.mubr.f32.gmra.mrb[0].mxu0 %v393
        %v509 = vpop.f32.mrb[0].mxu0
        %v510 = vadd.f32 %v427, %v509
        %v511 = vpop.f32.mrb[0].mxu0
        %512 = vmatprep.mubr.f32.mxu0 0.0
        %513 = vmatmul.mubr.f32.gmra.mrb[0].mxu0 %v394
        %v514 = vpop.f32.mrb[0].mxu0
        %v515 = vadd.f32 %v427, %v514
        %v516 = vpop.f32.mrb[0].mxu0
        %517 = vmatprep.mubr.f32.mxu0 0.0
        %518 = vmatmul.mubr.f32.gmra.mrb[0].mxu0 %v395
        %v519 = vpop.f32.mrb[0].mxu0
        %v520 = vadd.f32 %v427, %v519
        %v521 = vpop.f32.mrb[0].mxu0
        %522 = vmatprep.mubr.f32.mxu0 0.0
        %523 = vmatmul.mubr.f32.gmra.mrb[0].mxu0 %v396
        %v524 = vpop.f32.mrb[0].mxu0
        %v525 = vadd.f32 %v427, %v524
        %v526 = vpop.f32.mrb[0].mxu0
        %527 = vmatprep.mubr.f32.mxu0 0.0
        %528 = vmatmul.mubr.f32.gmra.mrb[0].mxu0 %v397
        %v529 = vpop.f32.mrb[0].mxu0
        %v530 = vadd.f32 %v427, %v529
        %v531 = vpop.f32.mrb[0].mxu0
        %532 = vmatprep.mubr.f32.mxu0 0.0
        %533 = vmatmul.mubr.f32.gmra.mrb[0].mxu0 %v398
        %v534 = vpop.f32.mrb[0].mxu0
        %v535 = vadd.f32 %v427, %v534
        %v536 = vpop.f32.mrb[0].mxu0
        %537 = vmatprep.mubr.f32.mxu0 0.0
        %538 = vmatmul.mubr.f32.gmra.mrb[0].mxu0 %v399
        %v539 = vpop.f32.mrb[0].mxu0
        %v540 = vadd.f32 %v427, %v539
        %v541 = vpop.f32.mrb[0].mxu0
        %542 = vmatprep.mubr.f32.mxu0 0.0
        %543 = vmatmul.mubr.f32.gmra.mrb[0].mxu0 %v400
        %v544 = vpop.f32.mrb[0].mxu0
        %v545 = vadd.f32 %v427, %v544
        %v546 = vpop.f32.mrb[0].mxu0
        %547 = vmatprep.mubr.f32.mxu0 0.0
        %548 = vmatmul.mubr.f32.gmra.mrb[0].mxu0 %v401
        %v549 = vpop.f32.mrb[0].mxu0
        %v550 = vadd.f32 %v427, %v549
        %v551 = vpop.f32.mrb[0].mxu0
        %552 = vmatprep.mubr.f32.mxu0 0.0
        %553 = vmatmul.mubr.f32.gmra.mrb[0].mxu0 %v402
        %v554 = vpop.f32.mrb[0].mxu0
        %v555 = vadd.f32 %v427, %v554
        %v556 = vpop.f32.mrb[0].mxu0
        %557 = vmatprep.mubr.f32.mxu0 0.0
        %558 = vmatmul.mubr.f32.gmra.mrb[0].mxu0 %v403
        %v559 = vpop.f32.mrb[0].mxu0
        %v560 = vadd.f32 %v427, %v559
        %v561 = vpop.f32.mrb[0].mxu0
        %562 = vmatprep.mubr.f32.mxu0 0.0
        %563 = vmatmul.mubr.f32.gmra.mrb[0].mxu0 %v404
        %v564 = vpop.f32.mrb[0].mxu0
        %v565 = vadd.f32 %v427, %v564
        %v566 = vpop.f32.mrb[0].mxu0
        %567 = vmatprep.mubr.f32.mxu0 0.0
        %568 = vmatmul.mubr.f32.gmra.mrb[0].mxu0 %v405
        %v569 = vpop.f32.mrb[0].mxu0
        %v570 = vadd.f32 %v427, %v569
        %v571 = vpop.f32.mrb[0].mxu0
        %572 = vdwg.mxu0
        %v573 = vmax.f32 %v495, 0.0
        %v574 = vmax.f32 %v500, 0.0
        %v575 = vmax.f32 %v505, 0.0
        %v576 = vmax.f32 %v510, 0.0
        %v577 = vmax.f32 %v515, 0.0
        %v578 = vmax.f32 %v520, 0.0
        %v579 = vmax.f32 %v525, 0.0
        %v580 = vmax.f32 %v530, 0.0
        %v581 = vmax.f32 %v535, 0.0
        %v582 = vmax.f32 %v540, 0.0
        %v583 = vmax.f32 %v545, 0.0
        %v584 = vmax.f32 %v550, 0.0
        %v585 = vmax.f32 %v555, 0.0
        %v586 = vmax.f32 %v560, 0.0
        %v587 = vmax.f32 %v565, 0.0
        %v588 = vmax.f32 %v570, 0.0
        %s589 = scalar_lea.vmem [#allocation7], 256
        %v590 = vld [vmem:[%s589] sm:$0xff]
        %v591 = vld [vmem:[%s589 + $0x8] sm:$0xff]
        %v592 = vld [vmem:[%s589 + $0x10] sm:$0xff]
        %v593 = vld [vmem:[%s589 + $0x18] sm:$0xff]
        %v594 = vld [vmem:[%s589 + $0x20] sm:$0xff]
        %v595 = vld [vmem:[%s589 + $0x28] sm:$0xff]
        %v596 = vld [vmem:[%s589 + $0x30] sm:$0xff]
        %v597 = vld [vmem:[%s589 + $0x38] sm:$0xff]
        %v598 = vld [vmem:[%s589 + $0x40] sm:$0xff]
        %v599 = vld [vmem:[%s589 + $0x48] sm:$0xff]
        %v600 = vld [vmem:[%s589 + $0x50] sm:$0xff]
        %v601 = vld [vmem:[%s589 + $0x58] sm:$0xff]
        %v602 = vld [vmem:[%s589 + $0x60] sm:$0xff]
        %v603 = vld [vmem:[%s589 + $0x68] sm:$0xff]
        %v604 = vld [vmem:[%s589 + $0x70] sm:$0xff]
        %v605 = vld [vmem:[%s589 + $0x78] sm:$0xff]
        %v606 = vld [vmem:[%s3 + $0x2] sm:$0x1]
        %v607 = vlaneseq
        %v608 = vshrl.u32 %v607, 7
        %v609 = vsub.s32 0, %v608
        %v610 = vrot.slane %v606, %v609
        %611 = vmatprep.subr.mxu0 0.0
        %612 = vmatpush1.msra.mxu0 %v590
        %613 = vmatprep.subr.mxu0 0.0
        %614 = vmatpush1.msra.mxu0 %v591
        %615 = vmatprep.subr.mxu0 0.0
        %616 = vmatpush1.msra.mxu0 %v592
        %617 = vmatprep.subr.mxu0 0.0
        %618 = vmatpush1.msra.mxu0 %v593
        %619 = vmatprep.subr.mxu0 0.0
        %620 = vmatpush1.msra.mxu0 %v594
        %621 = vmatprep.subr.mxu0 0.0
        %622 = vmatpush1.msra.mxu0 %v595
        %623 = vmatprep.subr.mxu0 0.0
        %624 = vmatpush1.msra.mxu0 %v596
        %625 = vmatprep.subr.mxu0 0.0
        %626 = vmatpush1.msra.mxu0 %v597
        %627 = vmatprep.subr.mxu0 0.0
        %628 = vmatpush1.msra.mxu0 %v598
        %629 = vmatprep.subr.mxu0 0.0
        %630 = vmatpush1.msra.mxu0 %v599
        %631 = vmatprep.subr.mxu0 0.0
        %632 = vmatpush1.msra.mxu0 %v600
        %633 = vmatprep.subr.mxu0 0.0
        %634 = vmatpush1.msra.mxu0 %v601
        %635 = vmatprep.subr.mxu0 0.0
        %636 = vmatpush1.msra.mxu0 %v602
        %637 = vmatprep.subr.mxu0 0.0
        %638 = vmatpush1.msra.mxu0 %v603
        %639 = vmatprep.subr.mxu0 0.0
        %640 = vmatpush1.msra.mxu0 %v604
        %641 = vmatprep.subr.mxu0 0.0
        %642 = vmatpush1.msra.mxu0 %v605
        %643 = vmatprep.subr.mxu0 0.0
        %644 = vmatpush1.msra.mxu0 0.0
        %645 = vmatprep.subr.mxu0 0.0
        %646 = vmatpush1.msra.mxu0 0.0
        %647 = vmatprep.subr.mxu0 0.0
        %648 = vmatpush1.msra.mxu0 0.0
        %649 = vmatprep.subr.mxu0 0.0
        %650 = vmatpush1.msra.mxu0 0.0
        %651 = vmatprep.subr.mxu0 0.0
        %652 = vmatpush1.msra.mxu0 0.0
        %653 = vmatprep.subr.mxu0 0.0
        %654 = vmatpush1.msra.mxu0 0.0
        %655 = vmatprep.subr.mxu0 0.0
        %656 = vmatpush1.msra.mxu0 0.0
        %657 = vmatprep.subr.mxu0 0.0
        %658 = vmatpush1.msra.mxu0 0.0
        %659 = vmatprep.subr.mxu0 0.0
        %660 = vmatpush1.msra.mxu0 0.0
        %661 = vmatprep.subr.mxu0 0.0
        %662 = vmatpush1.msra.mxu0 0.0
        %663 = vmatprep.subr.mxu0 0.0
        %664 = vmatpush1.msra.mxu0 0.0
        %665 = vmatprep.subr.mxu0 0.0
        %666 = vmatpush1.msra.mxu0 0.0
        %667 = vmatprep.subr.mxu0 0.0
        %668 = vmatpush1.msra.mxu0 0.0
        %669 = vmatprep.subr.mxu0 0.0
        %670 = vmatpush1.msra.mxu0 0.0
        %671 = vmatprep.subr.mxu0 0.0
        %672 = vmatpush1.msra.mxu0 0.0
        %673 = vmatprep.subr.mxu0 0.0
        %674 = vmatpush1.msra.mxu0 0.0
        %675 = vmatprep.mubr.f32.mxu0 0.0
        %676 = vmatmul.mubr.f32.gmra.mrb[0].mxu0 %v573
        %v677 = vpop.f32.mrb[0].mxu0
        %v678 = vadd.f32 %v610, %v677
        %v679 = vpop.f32.mrb[0].mxu0
        %680 = vmatprep.mubr.f32.mxu0 0.0
        %681 = vmatmul.mubr.f32.gmra.mrb[0].mxu0 %v574
        %v682 = vpop.f32.mrb[0].mxu0
        %v683 = vadd.f32 %v610, %v682
        %v684 = vpop.f32.mrb[0].mxu0
        %685 = vmatprep.mubr.f32.mxu0 0.0
        %686 = vmatmul.mubr.f32.gmra.mrb[0].mxu0 %v575
        %v687 = vpop.f32.mrb[0].mxu0
        %v688 = vadd.f32 %v610, %v687
        %v689 = vpop.f32.mrb[0].mxu0
        %690 = vmatprep.mubr.f32.mxu0 0.0
        %691 = vmatmul.mubr.f32.gmra.mrb[0].mxu0 %v576
        %v692 = vpop.f32.mrb[0].mxu0
        %v693 = vadd.f32 %v610, %v692
        %v694 = vpop.f32.mrb[0].mxu0
        %695 = vmatprep.mubr.f32.mxu0 0.0
        %696 = vmatmul.mubr.f32.gmra.mrb[0].mxu0 %v577
        %v697 = vpop.f32.mrb[0].mxu0
        %v698 = vadd.f32 %v610, %v697
        %v699 = vpop.f32.mrb[0].mxu0
        %700 = vmatprep.mubr.f32.mxu0 0.0
        %701 = vmatmul.mubr.f32.gmra.mrb[0].mxu0 %v578
        %v702 = vpop.f32.mrb[0].mxu0
        %v703 = vadd.f32 %v610, %v702
        %v704 = vpop.f32.mrb[0].mxu0
        %705 = vmatprep.mubr.f32.mxu0 0.0
        %706 = vmatmul.mubr.f32.gmra.mrb[0].mxu0 %v579
        %v707 = vpop.f32.mrb[0].mxu0
        %v708 = vadd.f32 %v610, %v707
        %v709 = vpop.f32.mrb[0].mxu0
        %710 = vmatprep.mubr.f32.mxu0 0.0
        %711 = vmatmul.mubr.f32.gmra.mrb[0].mxu0 %v580
        %v712 = vpop.f32.mrb[0].mxu0
        %v713 = vadd.f32 %v610, %v712
        %v714 = vpop.f32.mrb[0].mxu0
        %715 = vmatprep.mubr.f32.mxu0 0.0
        %716 = vmatmul.mubr.f32.gmra.mrb[0].mxu0 %v581
        %v717 = vpop.f32.mrb[0].mxu0
        %v718 = vadd.f32 %v610, %v717
        %v719 = vpop.f32.mrb[0].mxu0
        %720 = vmatprep.mubr.f32.mxu0 0.0
        %721 = vmatmul.mubr.f32.gmra.mrb[0].mxu0 %v582
        %v722 = vpop.f32.mrb[0].mxu0
        %v723 = vadd.f32 %v610, %v722
        %v724 = vpop.f32.mrb[0].mxu0
        %725 = vmatprep.mubr.f32.mxu0 0.0
        %726 = vmatmul.mubr.f32.gmra.mrb[0].mxu0 %v583
        %v727 = vpop.f32.mrb[0].mxu0
        %v728 = vadd.f32 %v610, %v727
        %v729 = vpop.f32.mrb[0].mxu0
        %730 = vmatprep.mubr.f32.mxu0 0.0
        %731 = vmatmul.mubr.f32.gmra.mrb[0].mxu0 %v584
        %v732 = vpop.f32.mrb[0].mxu0
        %v733 = vadd.f32 %v610, %v732
        %v734 = vpop.f32.mrb[0].mxu0
        %735 = vmatprep.mubr.f32.mxu0 0.0
        %736 = vmatmul.mubr.f32.gmra.mrb[0].mxu0 %v585
        %v737 = vpop.f32.mrb[0].mxu0
        %v738 = vadd.f32 %v610, %v737
        %v739 = vpop.f32.mrb[0].mxu0
        %740 = vmatprep.mubr.f32.mxu0 0.0
        %741 = vmatmul.mubr.f32.gmra.mrb[0].mxu0 %v586
        %v742 = vpop.f32.mrb[0].mxu0
        %v743 = vadd.f32 %v610, %v742
        %v744 = vpop.f32.mrb[0].mxu0
        %745 = vmatprep.mubr.f32.mxu0 0.0
        %746 = vmatmul.mubr.f32.gmra.mrb[0].mxu0 %v587
        %v747 = vpop.f32.mrb[0].mxu0
        %v748 = vadd.f32 %v610, %v747
        %v749 = vpop.f32.mrb[0].mxu0
        %750 = vmatprep.mubr.f32.mxu0 0.0
        %751 = vmatmul.mubr.f32.gmra.mrb[0].mxu0 %v588
        %v752 = vpop.f32.mrb[0].mxu0
        %v753 = vadd.f32 %v610, %v752
        %v754 = vpop.f32.mrb[0].mxu0
        %755 = vdwg.mxu0
        %756 = vst [vmem:[%s205] sm:$0xff] %v678
        %757 = vst [vmem:[%s205 + $0x8] sm:$0xff] %v683
        %758 = vst [vmem:[%s205 + $0x10] sm:$0xff] %v688
        %759 = vst [vmem:[%s205 + $0x18] sm:$0xff] %v693
        %760 = vst [vmem:[%s205 + $0x20] sm:$0xff] %v698
        %761 = vst [vmem:[%s205 + $0x28] sm:$0xff] %v703
        %762 = vst [vmem:[%s205 + $0x30] sm:$0xff] %v708
        %763 = vst [vmem:[%s205 + $0x38] sm:$0xff] %v713
        %764 = vst [vmem:[%s205 + $0x40] sm:$0xff] %v718
        %765 = vst [vmem:[%s205 + $0x48] sm:$0xff] %v723
        %766 = vst [vmem:[%s205 + $0x50] sm:$0xff] %v728
        %767 = vst [vmem:[%s205 + $0x58] sm:$0xff] %v733
        %768 = vst [vmem:[%s205 + $0x60] sm:$0xff] %v738
        %769 = vst [vmem:[%s205 + $0x68] sm:$0xff] %v743
        %770 = vst [vmem:[%s205 + $0x70] sm:$0xff] %v748
        %771 = vst [vmem:[%s205 + $0x78] sm:$0xff] %v753
        %s772 = sand.u32 %s99, 1
        %s773 = scalar_lea.sflag [#allocation6], %s772
        %s774 = sand.u32 %s99, 1
        %s775 = smul.addr %s774, 128
        %s776 = scalar_lea.vmem [#allocation9], %s775
        // Predicated region
        $region41: #{tpu_custom_call.1} parent=31 // pred_check
          %p777 = pneg %p109
        $region42: #{tpu_custom_call.1} parent=31 // pred_check_branch
          %779 = sbr.rel (%p777) target = $region44
        $region43: #{tpu_custom_call.1} parent=31 // pred_region
          %s780 = smul.u32 16, %s23
          %s782 = ssub.s32 2048, 2048
          %783 = vsyncadd %s773, %s782
          %s784 = smul.addr %s780, 128
          %s785 = scalar_lea.hbm %s4, %s784
          %s786 = sshll.u32 %s776, 4
          %s787 = int_to_ptr.vmem [resolvable:$true] %s786
          %792 = dma.vmem_to_hbm [thread:$0]  %s787, 2048, %s785, %s773, 128, 128, 8
        $region44: #{tpu_custom_call.1} parent=31 // pred_fallthru
          _
      $region32: #{tpu_custom_call.1} parent=5 // pred_fallthru
        _
      %p793 = scmp.le.s32.totalorder 2, %s18
      // Predicated region
      $region45: #{tpu_custom_call.1} parent=5 // pred_check
        %p794 = pneg %p793
      $region46: #{tpu_custom_call.1} parent=5 // pred_check_branch
        %796 = sbr.rel (%p794) target = $region48
      $region47: #{tpu_custom_call.1} parent=5 // pred_region
        %s797 = ssub.s32 %s18, 2
        // Predicated region
        $region49: #{tpu_custom_call.1} parent=47 // pred_check
          %p798 = pneg %p115
        $region50: #{tpu_custom_call.1} parent=47 // pred_check_branch
          %800 = sbr.rel (%p798) target = $region52
        $region51: #{tpu_custom_call.1} parent=47 // pred_region
          %s801 = sand.u32 %s100, 1
          %s802 = scalar_lea.sflag [#allocation6], %s801
          %s803 = sand.u32 %s100, 1
          %s804 = smul.addr %s803, 128
          %s805 = scalar_lea.vmem [#allocation9], %s804
          %806 = dma.done %s802, 2048
        $region52: #{tpu_custom_call.1} parent=47 // pred_fallthru
          _
      $region48: #{tpu_custom_call.1} parent=5 // pred_fallthru
        _
    $region6: #{tpu_custom_call.1} parent=1 // loop_footer
      %s22 = sadd.s32 1, %s18
    $region7: #{tpu_custom_call.1} parent=1 // loop_footer_branch
      %17 = sbr.rel target = $region3
    $region8: #{tpu_custom_call.1} parent=1 // loop_exit
      _
    %807 = vsyncpa [#allocation5], 1
    %s808 = scalar_lea.sflag [#allocation5], 1
    %809 = vsyncpa %s808, 1
    %810 = vsyncpa [#allocation8], 1
    %811 = vsyncpa [#allocation6], 1
    %s812 = scalar_lea.sflag [#allocation6], 1
    %813 = vsyncpa %s812, 1

</llo_original>
